<compile_context>
chip_gen: v6e
topology: v6e:2x2x1
jax: 0.10.0
libtpu: 0.0.40
codegen_flags: <defaults>
</compile_context>

<pallas_src>
import jax
import jax.numpy as jnp
from jax.experimental import pallas as pl
from jax.experimental.pallas import tpu as pltpu

IN_FEATURES = 10
OUT_FEATURES = 10
SUBLANE = 8       # f32 sublane width: batch tiles must be a multiple of this
MAX_TB = 1024     # max batch-tile rows (amortizes per-grid-step overhead)


def _round_up(n, m):
    return ((n + m - 1) // m) * m


def _choose_batch_tile(B):
    """Pick a batch tile: multiple of 8 (or == B), >=2 grid steps when possible."""
    if B <= 2 * SUBLANE:
        # Single block equal to the full batch extent (always a legal block).
        return B
    # Aim for at least 2 grid steps so v7x can feed both TensorCores, while
    # keeping tiles large (fewer steps) and a multiple of the sublane count.
    tb = _round_up(pl.cdiv(B, 2), SUBLANE)
    return min(MAX_TB, tb)


def linear_kernel(x_ref, w_ref, b_ref, o_ref):
    # x_ref: [TB, 10]  w_ref: [10, 10]  b_ref: [1, 10]  o_ref: [TB, 10]
    acc = jnp.dot(x_ref[...], w_ref[...], preferred_element_type=jnp.float32)
    o_ref[...] = (acc + b_ref[...]).astype(o_ref.dtype)


@jax.jit
def linear_pallas(x, w, b):
    """y = x @ w.T + b  (nn.Linear semantics: w is [out, in], b is [out])."""
    B = x.shape[0]
    dtype = x.dtype

    # Narrow, zero-copy operands: just a (10,10) transpose and a (1,10) reshape.
    w_t = w.T.astype(dtype)                      # [in, out] = [10, 10]
    b_p = b.astype(dtype).reshape(1, OUT_FEATURES)

    TB = _choose_batch_tile(B)
    grid = (pl.cdiv(B, TB),)                     # tail block masked on writeback

    y = pl.pallas_call(
        linear_kernel,
        out_shape=jax.ShapeDtypeStruct((B, OUT_FEATURES), dtype),
        grid_spec=pl.GridSpec(
            grid=grid,
            in_specs=[
                # x: tiled over batch, double-buffered by the pipeline.
                pl.BlockSpec((TB, IN_FEATURES), lambda i: (i, 0),
                             memory_space=pltpu.MemorySpace.VMEM),
                # weight: full-extent block, VMEM-resident every step.
                pl.BlockSpec((IN_FEATURES, OUT_FEATURES), lambda i: (0, 0),
                             memory_space=pltpu.MemorySpace.VMEM),
                # bias: (1, 10) resident block.
                pl.BlockSpec((1, OUT_FEATURES), lambda i: (0, 0),
                             memory_space=pltpu.MemorySpace.VMEM),
            ],
            out_specs=pl.BlockSpec((TB, OUT_FEATURES), lambda i: (i, 0),
                                   memory_space=pltpu.MemorySpace.VMEM),
        ),
        compiler_params=pltpu.CompilerParams(
            # Batch tiles are independent: lets v7x split the grid across its
            # 2 TensorCores; harmless on v5e/v6e (1 TC).
            dimension_semantics=("parallel",),
        ),
    )(x, w_t, b_p)

    return y


def init_params(key):
    # Deterministic init mimicking nn.Linear's uniform(-1/sqrt(fan_in), ...).
    k_w, k_b = jax.random.split(key)
    bound = 1.0 / jnp.sqrt(jnp.float32(IN_FEATURES))
    w = jax.random.uniform(
        k_w, (OUT_FEATURES, IN_FEATURES), jnp.float32, -bound, bound
    )
    b = jax.random.uniform(k_b, (OUT_FEATURES,), jnp.float32, -bound, bound)
    return w, b


if __name__ == "__main__":
    key = jax.random.PRNGKey(0)
    k_params, k_x = jax.random.split(key)

    w, b = init_params(k_params)  # w: [out, in], b: [out] (PyTorch layout)

    batch = 8
    x = jax.random.normal(k_x, (batch, IN_FEATURES), jnp.float32)

    y = linear_pallas(x, w, b)
    jax.block_until_ready(y)

    # Sanity check against plain JAX reference of the nn.Linear forward.
    y_ref = x @ w.T + b
    assert y.shape == y_ref.shape, "shape mismatch vs reference"
    assert jnp.allclose(y, y_ref, atol=1e-5, rtol=1e-5), "mismatch vs reference"

    # Also exercise a batch that doesn't divide the tile (tail-block masking).
    x_big = jax.random.normal(k_x, (1000, IN_FEATURES), jnp.float32)
    y_big = linear_pallas(x_big, w, b)
    jax.block_until_ready(y_big)
    assert jnp.allclose(y_big, x_big @ w.T + b, atol=1e-5, rtol=1e-5), \
        "mismatch vs reference (large batch)"

    print("KERNEL_OK")
</pallas_src>

<mosaic_0001>
module attributes {stable_mosaic.version = 11 : i64} {
  func.func @linear_kernel(%arg0: i32, %arg1: memref<8x10xf32, #tpu.memory_space<vmem>>, %arg2: memref<10x10xf32, #tpu.memory_space<vmem>>, %arg3: memref<1x10xf32, #tpu.memory_space<vmem>>, %arg4: memref<8x10xf32, #tpu.memory_space<vmem>>) attributes {dimension_semantics = [#tpu.dimension_semantics<parallel>], iteration_bounds = array<i64: 1>, scalar_prefetch = 0 : i64, scratch_operands = 0 : i64, tpu.core_type = #tpu.core_type<tc>, window_params = [{transform_indices = @transform_0, window_bounds = array<i64: 8, 10>}, {pipeline_mode = #tpu.pipeline_mode<synchronous>, transform_indices = @transform_1, window_bounds = array<i64: 10, 10>}, {pipeline_mode = #tpu.pipeline_mode<synchronous>, transform_indices = @transform_2, window_bounds = array<i64: 1, 10>}, {transform_indices = @transform_3, window_bounds = array<i64: 8, 10>}]} {
    %c0 = arith.constant 0 : index
    %c0_0 = arith.constant 0 : index
    %0 = vector.load %arg1[%c0, %c0_0] : memref<8x10xf32, #tpu.memory_space<vmem>>, vector<8x10xf32>
    %c0_1 = arith.constant 0 : index
    %c0_2 = arith.constant 0 : index
    %1 = vector.load %arg2[%c0_1, %c0_2] : memref<10x10xf32, #tpu.memory_space<vmem>>, vector<10x10xf32>
    %cst = arith.constant dense<0.000000e+00> : vector<8x10xf32>
    %2 = tpu.matmul %0, %1, %cst {dimension_numbers = #tpu.dot_dimension_numbers<[1], [0], [0], [1], [0, 0, 1, 1], [], []>} : vector<8x10xf32>, vector<10x10xf32>, vector<8x10xf32> -> vector<8x10xf32>
    %c0_3 = arith.constant 0 : index
    %c0_4 = arith.constant 0 : index
    %3 = vector.load %arg3[%c0_3, %c0_4] : memref<1x10xf32, #tpu.memory_space<vmem>>, vector<1x10xf32>
    %4 = vector.broadcast %3 : vector<1x10xf32> to vector<8x10xf32>
    %5 = arith.addf %2, %4 : vector<8x10xf32>
    %c0_5 = arith.constant 0 : index
    %c0_6 = arith.constant 0 : index
    %6 = vector.load %arg4[%c0_5, %c0_6] : memref<8x10xf32, #tpu.memory_space<vmem>>, vector<8x10xf32>
    tpu.vector_store %arg4[%c0_5, %c0_6], %5 {strides = array<i32>} : memref<8x10xf32, #tpu.memory_space<vmem>>, vector<8x10xf32>,
    return
  }
  func.func @transform_0(%arg0: i32) -> (i32, i32) {
    %c0_i32 = arith.constant 0 : i32
    %c0_i32_0 = arith.constant 0 : i32
    return %arg0, %c0_i32 : i32, i32
  }
  func.func @transform_1(%arg0: i32) -> (i32, i32) {
    %c0_i32 = arith.constant 0 : i32
    %c0_i32_0 = arith.constant 0 : i32
    %c0_i32_1 = arith.constant 0 : i32
    return %c0_i32, %c0_i32_0 : i32, i32
  }
  func.func @transform_2(%arg0: i32) -> (i32, i32) {
    %c0_i32 = arith.constant 0 : i32
    %c0_i32_0 = arith.constant 0 : i32
    %c0_i32_1 = arith.constant 0 : i32
    return %c0_i32, %c0_i32_0 : i32, i32
  }
  func.func @transform_3(%arg0: i32) -> (i32, i32) {
    %c0_i32 = arith.constant 0 : i32
    %c0_i32_0 = arith.constant 0 : i32
    return %arg0, %c0_i32 : i32, i32
  }
}

</mosaic_0001>

<llo_original>
// kernel: linear_pallas.1
$region0: #{linear_pallas.1}
  #allocation0 [shape = 'u32[]', space=smem, size = 0x4, offset = 0x4, fixed_abs, tag = 'smem constant byte address 0x4 - core index']
  #allocation1 [shape = 'u32[144,128]{1,0:T(1,128)}', space=vmem, size = 0x12000, scoped, tag = 'internal scratch']
  %s0 = inlined_call_operand.vmem [shape: f32[8,10], index: 0, kind: input, shape index: {}]
  %s1 = inlined_call_operand.vmem [shape: f32[10,10], index: 1, kind: input, shape index: {}]
  %s2 = inlined_call_operand.vmem [shape: f32[1,10], index: 2, kind: input, shape index: {}]
  %s3 = inlined_call_operand.hbm [shape: f32[8,10], index: 3, kind: output, shape index: {}]
  %s4 = sld [smem:[#allocation0]]
  $region22: #{linear_pallas.1} parent=0
    _
  %s6 = ssub.s32 1, %s4
  %s7 = scalar_select 0, %s6, %s4
  $region1: #{linear_pallas.1} parent=0
    #allocation2 [shape = 'u8[4096]{0}', space=vmem, size = 0x1000, scoped, tag = 'output window, operand 0, single buffered']
    #allocation3 [shape = 's32[1]{0}', space=sflag, size = 0x4, scoped, tag = 'scoped memory for linear_pallas.1']
    %8 = vsyncpa [#allocation3], 0
    // Predicated region
    $region2: #{linear_pallas.1} parent=1 // pred_check
      _
    $region3: #{linear_pallas.1} parent=1 // pred_check_branch
      %10 = sbr.rel (0) target = $region5
    $region4: #{linear_pallas.1} parent=1 // pred_region
      _
    $region5: #{linear_pallas.1} parent=1 // pred_fallthru
      _
    // Predicated region
    $region6: #{linear_pallas.1} parent=1 // pred_check
      _
    $region7: #{linear_pallas.1} parent=1 // pred_check_branch
      %12 = sbr.rel (0) target = $region9
    $region8: #{linear_pallas.1} parent=1 // pred_region
      _
    $region9: #{linear_pallas.1} parent=1 // pred_fallthru
      _
    // Predicated region
    $region10: #{linear_pallas.1} parent=1 // pred_check
      _
    $region11: #{linear_pallas.1} parent=1 // pred_check_branch
      %14 = sbr.rel (0) target = $region13
    $region12: #{linear_pallas.1} parent=1 // pred_region
      _
    $region13: #{linear_pallas.1} parent=1 // pred_fallthru
      _
    %v15 = vld [vmem:[%s0] sm:$0xff]
    %v16 = vld [vmem:[%s1] sm:$0xff]
    %v17 = vld [vmem:[%s1 + $0x8] sm:$0x3]
    %v18 = vld [vmem:[%s2] sm:$0x1]
    %v20 = vlaneseq
    %v21 = vshrl.u32 %v20, 7
    %v22 = vsub.s32 0, %v21
    %v23 = vrot.slane %v18, %v22
    %vm25 = vcmask 80896
    %v27 = vsel %vm25, %v15, 0
    %vm29 = vcmask 1041408
    %v31 = vsel %vm29, %v17, 0
    %33 = vmatprep.subr.mxu0 0.0
    %34 = vmatpush1.msra.mxu0 0.0
    %35 = vmatprep.subr.mxu0 0.0
    %36 = vmatpush1.msra.mxu0 0.0
    %37 = vmatprep.subr.mxu0 0.0
    %38 = vmatpush1.msra.mxu0 0.0
    %39 = vmatprep.subr.mxu0 0.0
    %40 = vmatpush1.msra.mxu0 0.0
    %41 = vmatprep.subr.mxu0 0.0
    %42 = vmatpush1.msra.mxu0 0.0
    %43 = vmatprep.subr.mxu0 0.0
    %44 = vmatpush1.msra.mxu0 0.0
    %45 = vmatprep.subr.mxu0 0.0
    %46 = vmatpush1.msra.mxu0 0.0
    %47 = vmatprep.subr.mxu0 0.0
    %48 = vmatpush1.msra.mxu0 0.0
    %49 = vmatprep.subr.mxu0 0.0
    %50 = vmatpush1.msra.mxu0 0.0
    %51 = vmatprep.subr.mxu0 0.0
    %52 = vmatpush1.msra.mxu0 0.0
    %53 = vmatprep.subr.mxu0 0.0
    %54 = vmatpush1.msra.mxu0 0.0
    %55 = vmatprep.subr.mxu0 0.0
    %56 = vmatpush1.msra.mxu0 0.0
    %57 = vmatprep.subr.mxu0 0.0
    %58 = vmatpush1.msra.mxu0 0.0
    %59 = vmatprep.subr.mxu0 0.0
    %60 = vmatpush1.msra.mxu0 0.0
    %61 = vmatprep.subr.mxu0 0.0
    %62 = vmatpush1.msra.mxu0 %v31
    %63 = vmatprep.subr.mxu0 0.0
    %64 = vmatpush1.msra.mxu0 %v16
    %65 = vmatprep.subr.mxu0 0.0
    %66 = vmatpush2.msra.mxu0 0.0
    %67 = vmatprep.subr.mxu0 0.0
    %68 = vmatpush2.msra.mxu0 0.0
    %69 = vmatprep.subr.mxu0 0.0
    %70 = vmatpush2.msra.mxu0 0.0
    %71 = vmatprep.subr.mxu0 0.0
    %72 = vmatpush2.msra.mxu0 0.0
    %73 = vmatprep.subr.mxu0 0.0
    %74 = vmatpush2.msra.mxu0 0.0
    %75 = vmatprep.subr.mxu0 0.0
    %76 = vmatpush2.msra.mxu0 0.0
    %77 = vmatprep.subr.mxu0 0.0
    %78 = vmatpush2.msra.mxu0 0.0
    %79 = vmatprep.subr.mxu0 0.0
    %80 = vmatpush2.msra.mxu0 0.0
    %81 = vmatprep.subr.mxu0 0.0
    %82 = vmatpush2.msra.mxu0 0.0
    %83 = vmatprep.subr.mxu0 0.0
    %84 = vmatpush2.msra.mxu0 0.0
    %85 = vmatprep.subr.mxu0 0.0
    %86 = vmatpush2.msra.mxu0 0.0
    %87 = vmatprep.subr.mxu0 0.0
    %88 = vmatpush2.msra.mxu0 0.0
    %89 = vmatprep.subr.mxu0 0.0
    %90 = vmatpush2.msra.mxu0 0.0
    %91 = vmatprep.subr.mxu0 0.0
    %92 = vmatpush2.msra.mxu0 0.0
    %93 = vmatprep.subr.mxu0 0.0
    %94 = vmatpush2.msra.mxu0 0.0
    %95 = vmatprep.subr.mxu0 0.0
    %96 = vmatpush2.msra.mxu0 0.0
    %97 = vmatprep.mubr.f32.mxu0 0.0
    %98 = vmatmul.mubr.f32.gmra.mxu0 %v27
    %v99 = vpop.f32.mrf.mxu0
    %v100 = vadd.f32 %v23, %v99
    %v101 = vpop.f32.mrf.mxu0
    %102 = vdwg.mxu0
    %103 = vst.msk [vmem:[#allocation2] sm:$0xff] %vm25, %v100
    // Predicated region
    $region14: #{linear_pallas.1} parent=1 // pred_check
      _
    $region15: #{linear_pallas.1} parent=1 // pred_check_branch
      %105 = sbr.rel (0) target = $region17
    $region16: #{linear_pallas.1} parent=1 // pred_region
      %s107 = ssub.s32 128, 128
      %108 = vsyncadd [#allocation3], %s107
      %s110 = sshll.u32 [#allocation2], 4
      %s111 = int_to_ptr.vmem [resolvable:$true] %s110
      %113 = dma.vmem_to_hbm [thread:$0]  %s111, 128, %s3, [#allocation3]
    $region17: #{linear_pallas.1} parent=1 // pred_fallthru
      _
    // Predicated region
    $region18: #{linear_pallas.1} parent=1 // pred_check
      _
    $region19: #{linear_pallas.1} parent=1 // pred_check_branch
      %115 = sbr.rel (0) target = $region21
    $region20: #{linear_pallas.1} parent=1 // pred_region
      %116 = dma.done [#allocation3], 128
    $region21: #{linear_pallas.1} parent=1 // pred_fallthru
      _
    %117 = vsyncpa [#allocation3], 1

</llo_original>
